<compile_context>
chip_gen: v7x
topology: tpu7x:2x2x1
jax: 0.10.0
libtpu: 0.0.40
codegen_flags: <defaults>
</compile_context>

<pallas_src>
import jax
import jax.numpy as jnp
from jax.experimental import pallas as pl
from jax.experimental.pallas import tpu as pltpu


# ----------------------------------------------------------------------------- helpers
def _cdiv(a, b):
    return (a + b - 1) // b


def _round_up(n, m):
    return ((n + m - 1) // m) * m


def _pad_cols(a, cols):
    r, c = a.shape
    if c == cols:
        return a
    return jnp.pad(a, ((0, 0), (0, cols - c)))


def _pad2d(a, rows, cols):
    r, c = a.shape
    if r == rows and c == cols:
        return a
    return jnp.pad(a, ((0, rows - r), (0, cols - c)))


def _pick_tn(h_pad, block_n):
    """Largest multiple of 128 that divides h_pad and is <= max(block_n, 128)."""
    k = h_pad // 128
    m_max = max(block_n // 128, 1)
    for m in range(min(m_max, k), 0, -1):
        if k % m == 0:
            return 128 * m
    return 128


# ----------------------------------------------------------------------------- param prep (run once)
def prepare_mlp_params(params, *, compute_dtype=jnp.bfloat16):
    """Pad hidden dims to multiples of 128 and cast weights to compute_dtype ONCE.

    Biases stay f32 (the bias+ReLU epilogue is f32 on all chips). The fc3
    weight is stored as an f32 row so the decoder head runs as a VPU multiply +
    lane reduction instead of an N=1 MXU matmul.
    """
    w1 = params["w1"]
    d_in, h = w1.shape
    h_pad = _round_up(h, 128)
    prep = {
        # Keep w1's input-feature dim unpadded so x never needs a pad copy.
        "w1": _pad_cols(w1, h_pad).astype(compute_dtype),
        "b1": _pad_cols(params["b1"].reshape(1, -1), h_pad).astype(jnp.float32),
        "w2": _pad2d(params["w2"], h_pad, h_pad).astype(compute_dtype),
        "b2": _pad_cols(params["b2"].reshape(1, -1), h_pad).astype(jnp.float32),
        "decoder": "w3" in params,
        "d_in": int(d_in),
        "h": int(h),
        "h_pad": int(h_pad),
        "compute_dtype": compute_dtype,
    }
    if prep["decoder"]:
        prep["w3_row"] = _pad_cols(params["w3"].reshape(1, -1), h_pad).astype(jnp.float32)
        prep["b3"] = params["b3"].reshape((1,)).astype(jnp.float32)
    return prep


# ----------------------------------------------------------------------------- kernels
def _mlp_encoder_kernel(x_ref, w1_ref, b1_ref, w2_ref, b2_ref, o_ref, h1_ref):
    nj = pl.program_id(1)

    @pl.when(nj == 0)
    def _():
        # fc1 + relu: computed once per batch tile, reused across all N tiles.
        h1 = jnp.dot(x_ref[...].astype(w1_ref.dtype), w1_ref[...],
                     preferred_element_type=jnp.float32)
        h1_ref[...] = jnp.maximum(h1 + b1_ref[...], 0.0)

    # fc2 + relu on one (H_pad, TN) column tile of w2.
    h2 = jnp.dot(h1_ref[...].astype(w2_ref.dtype), w2_ref[...],
                 preferred_element_type=jnp.float32)
    o_ref[...] = jnp.maximum(h2 + b2_ref[...], 0.0).astype(o_ref.dtype)


def _mlp_decoder_kernel(x_ref, w1_ref, b1_ref, w2_ref, b2_ref, w3_ref, b3_ref,
                        o_ref, h1_ref, acc_ref):
    nj = pl.program_id(1)

    @pl.when(nj == 0)
    def _():
        h1 = jnp.dot(x_ref[...].astype(w1_ref.dtype), w1_ref[...],
                     preferred_element_type=jnp.float32)
        h1_ref[...] = jnp.maximum(h1 + b1_ref[...], 0.0)
        acc_ref[...] = jnp.zeros_like(acc_ref)

    h2 = jnp.dot(h1_ref[...].astype(w2_ref.dtype), w2_ref[...],
                 preferred_element_type=jnp.float32)
    h2 = jnp.maximum(h2 + b2_ref[...], 0.0)
    # fc3 partial contribution of this N tile: VPU multiply + XLU lane sum.
    acc_ref[...] += jnp.sum(h2 * w3_ref[...], axis=-1, keepdims=True)

    @pl.when(nj == pl.num_programs(1) - 1)
    def _():
        o_ref[...] = (acc_ref[...] + b3_ref[0]).astype(o_ref.dtype)


# ----------------------------------------------------------------------------- wrapper
def mlp_forward(x, prepared, *, block_batch=256, block_n=512):
    """Fused MLP forward.

    x: (B, D_in) float32.   prepared: output of prepare_mlp_params().
    Returns (B, H), or (B, 1) if the params include the fc3 decoder head.
    block_batch: batch tile cap (256 for v6e/v7x; 128 is a better fit on v5e).
    block_n:     fc2 output-column tile cap (caps w2 VMEM residency).
    """
    B, D = x.shape
    assert D == prepared["d_in"], "x feature dim does not match the params"
    H, H_pad = prepared["h"], prepared["h_pad"]
    decoder = prepared["decoder"]
    cdt = prepared["compute_dtype"]
    itemsize_c = jnp.dtype(cdt).itemsize

    # Batch tiling: no padding; ragged last tile is masked by Pallas. Use >= 2
    # tiles whenever possible so both v7x TensorCores get work on the
    # "parallel" axis (harmless on v5e/v6e: ~0.35 us extra per grid step).
    num_b = max(_cdiv(B, block_batch), 2 if B >= 16 else 1)
    TB = _round_up(_cdiv(B, num_b), 8)
    grid_b = _cdiv(B, TB)

    # N tiling over fc2 output columns; TN divides H_pad so no ragged w2 tile
    # can leak garbage into the decoder reduction.
    TN = _pick_tn(H_pad, block_n)
    grid_n = H_pad // TN

    x_spec = pl.BlockSpec((TB, D), lambda i, j: (i, 0))
    w1_spec = pl.BlockSpec((D, H_pad), lambda i, j: (0, 0))      # VMEM-resident
    b1_spec = pl.BlockSpec((1, H_pad), lambda i, j: (0, 0))
    w2_spec = pl.BlockSpec((H_pad, TN), lambda i, j: (0, j))
    b2_spec = pl.BlockSpec((1, TN), lambda i, j: (0, j))

    scratch = [pltpu.VMEM((TB, H_pad), jnp.float32)]             # h1

    if decoder:
        kernel = _mlp_decoder_kernel
        args = (x, prepared["w1"], prepared["b1"], prepared["w2"],
                prepared["b2"], prepared["w3_row"], prepared["b3"])
        in_specs = [x_spec, w1_spec, b1_spec, w2_spec, b2_spec,
                    pl.BlockSpec((1, TN), lambda i, j: (0, j)),
                    pl.BlockSpec(memory_space=pltpu.MemorySpace.SMEM)]
        out_shape = jax.ShapeDtypeStruct((B, 1), x.dtype)
        out_spec = pl.BlockSpec((TB, 1), lambda i, j: (i, 0))
        scratch.append(pltpu.VMEM((TB, 1), jnp.float32))          # fc3 accumulator
        flops = 2 * B * (D * H_pad + H_pad * H_pad + H_pad)
    else:
        kernel = _mlp_encoder_kernel
        args = (x, prepared["w1"], prepared["b1"], prepared["w2"], prepared["b2"])
        in_specs = [x_spec, w1_spec, b1_spec, w2_spec, b2_spec]
        out_shape = jax.ShapeDtypeStruct((B, H), x.dtype)
        out_spec = pl.BlockSpec((TB, TN), lambda i, j: (i, j))
        flops = 2 * B * (D * H_pad + H_pad * H_pad)

    bytes_accessed = int(
        sum(int(a.size) * a.dtype.itemsize for a in args)
        + out_shape.size * jnp.dtype(out_shape.dtype).itemsize)

    # Explicit VMEM budget: resident w1/b1, double-buffered x/w2/b2/out tiles,
    # h1/acc scratch plus f32 temporaries, x2 headroom; clamp to v7x's 64 MiB.
    est = (2 * D * H_pad * itemsize_c            # w1 (default double-buffered)
           + 2 * H_pad * 4                       # b1
           + 2 * H_pad * TN * itemsize_c         # w2 tile
           + 4 * TN * 4                          # b2 / w3 tiles
           + 2 * TB * D * 4                      # x tile
           + 2 * TB * max(TN, 128) * 4           # out tile
           + TB * H_pad * 4                      # h1 scratch
           + 4 * TB * TN * 4                     # in-kernel temporaries
           + TB * 4)                             # fc3 accumulator
    vmem_limit = int(min(64 << 20, max(16 << 20, 2 * est)))

    return pl.pallas_call(
        kernel,
        out_shape=out_shape,
        grid_spec=pltpu.PrefetchScalarGridSpec(
            num_scalar_prefetch=0,
            grid=(grid_b, grid_n),
            in_specs=in_specs,
            out_specs=out_spec,
            scratch_shapes=scratch,
        ),
        compiler_params=pltpu.CompilerParams(
            dimension_semantics=("parallel", "arbitrary"),
            vmem_limit_bytes=vmem_limit),
        cost_estimate=pl.CostEstimate(
            flops=int(flops), transcendentals=0, bytes_accessed=bytes_accessed),
    )(*args)


# ----------------------------------------------------------------------------- init / reference
def init_mlp_params(key, initial_size, mlp_size, decoder_layer=False):
    """Deterministic init mimicking torch.nn.Linear's uniform(-1/sqrt(fan_in), .)."""
    def linear_init(k, fan_in, fan_out):
        kw, kb = jax.random.split(k)
        bound = 1.0 / jnp.sqrt(fan_in)
        w = jax.random.uniform(kw, (fan_in, fan_out), jnp.float32, -bound, bound)
        b = jax.random.uniform(kb, (1, fan_out), jnp.float32, -bound, bound)
        return w, b

    k1, k2, k3 = jax.random.split(key, 3)
    w1, b1 = linear_init(k1, initial_size, mlp_size)
    w2, b2 = linear_init(k2, mlp_size, mlp_size)
    params = {"w1": w1, "b1": b1, "w2": w2, "b2": b2}
    if decoder_layer:
        w3, b3 = linear_init(k3, mlp_size, 1)
        params["w3"] = w3
        params["b3"] = b3
    return params


def mlp_reference(x, params, *, decoder_layer=False):
    h = jnp.maximum(x @ params["w1"] + params["b1"], 0.0)
    h = jnp.maximum(h @ params["w2"] + params["b2"], 0.0)
    if decoder_layer:
        h = h @ params["w3"] + params["b3"]
    return h


# ----------------------------------------------------------------------------- demo / checks
if __name__ == "__main__":
    key = jax.random.PRNGKey(0)
    k_x, k_xbig, k_p1, k_p2, k_p3 = jax.random.split(key, 5)

    batch, initial_size, mlp_size = 8, 16, 32
    x = jax.random.normal(k_x, (batch, initial_size), dtype=jnp.float32)

    params_enc = init_mlp_params(k_p1, initial_size, mlp_size, decoder_layer=False)
    params_dec = init_mlp_params(k_p2, initial_size, mlp_size, decoder_layer=True)

    # f32 operand path. Tolerances allow for TPU's default bf16 matmul
    # precision in the pure-JAX reference vs. the kernel's MXU path.
    prep_enc_f32 = prepare_mlp_params(params_enc, compute_dtype=jnp.float32)
    prep_dec_f32 = prepare_mlp_params(params_dec, compute_dtype=jnp.float32)
    y_enc = mlp_forward(x, prep_enc_f32)
    y_dec = mlp_forward(x, prep_dec_f32)
    jax.block_until_ready((y_enc, y_dec))

    ref_enc = mlp_reference(x, params_enc, decoder_layer=False)
    ref_dec = mlp_reference(x, params_dec, decoder_layer=True)
    assert y_enc.shape == (batch, mlp_size)
    assert y_dec.shape == (batch, 1)
    assert jnp.allclose(y_enc, ref_enc, atol=2e-2, rtol=2e-2)
    assert jnp.allclose(y_dec, ref_dec, atol=2e-2, rtol=2e-2)

    # Larger non-divisible batch + wider hidden: exercises the ragged last
    # batch tile (B=300, two tiles of 152), the multi-step N axis
    # (H_pad=256, TN=128 -> 2 N tiles) and the decoder's cross-N accumulation.
    big_batch, big_hidden = 300, 256
    x_big = jax.random.normal(k_xbig, (big_batch, initial_size), dtype=jnp.float32)
    params_big = init_mlp_params(k_p3, initial_size, big_hidden, decoder_layer=True)
    prep_big = prepare_mlp_params(params_big, compute_dtype=jnp.float32)
    y_big = mlp_forward(x_big, prep_big, block_batch=256, block_n=128)
    jax.block_until_ready(y_big)
    ref_big = mlp_reference(x_big, params_big, decoder_layer=True)
    assert y_big.shape == (big_batch, 1)
    assert jnp.allclose(y_big, ref_big, atol=5e-2, rtol=5e-2)

    # Default bf16 operand path (recommended on v5e/v6e/v7x MXUs): f32
    # accumulation + f32 epilogue, looser tolerance vs. the f32 reference.
    prep_enc_bf16 = prepare_mlp_params(params_enc)  # compute_dtype=bf16 default
    y_bf16 = mlp_forward(x, prep_enc_bf16)
    jax.block_until_ready(y_bf16)
    assert jnp.allclose(y_bf16, ref_enc, atol=1e-1, rtol=1e-1)

    print("KERNEL_OK")
</pallas_src>

<mosaic_0001>
module attributes {stable_mosaic.version = 11 : i64} {
  func.func @_mlp_encoder_kernel(%arg0: i32, %arg1: i32, %arg2: memref<8x16xf32, #tpu.memory_space<vmem>>, %arg3: memref<16x128xf32, #tpu.memory_space<vmem>>, %arg4: memref<1x128xf32, #tpu.memory_space<vmem>>, %arg5: memref<128x128xf32, #tpu.memory_space<vmem>>, %arg6: memref<1x128xf32, #tpu.memory_space<vmem>>, %arg7: memref<8x128xf32, #tpu.memory_space<vmem>>, %arg8: memref<8x128xf32, #tpu.memory_space<vmem>>) attributes {dimension_semantics = [#tpu.dimension_semantics<parallel>, #tpu.dimension_semantics<arbitrary>], iteration_bounds = array<i64: 1, 1>, scalar_prefetch = 0 : i64, scratch_operands = 1 : i64, tpu.core_type = #tpu.core_type<tc>, window_params = [{transform_indices = @transform_0, window_bounds = array<i64: 8, 16>}, {pipeline_mode = #tpu.pipeline_mode<synchronous>, transform_indices = @transform_1, window_bounds = array<i64: 16, 128>}, {pipeline_mode = #tpu.pipeline_mode<synchronous>, transform_indices = @transform_2, window_bounds = array<i64: 1, 128>}, {transform_indices = @transform_3, window_bounds = array<i64: 128, 128>}, {transform_indices = @transform_4, window_bounds = array<i64: 1, 128>}, {transform_indices = @transform_5, window_bounds = array<i64: 8, 128>}]} {
    %c0_i32 = arith.constant 0 : i32
    %0 = arith.cmpi eq, %arg1, %c0_i32 : i32
    %1 = arith.extui %0 : i1 to i32
    %c0_i32_0 = arith.constant 0 : i32
    %2 = arith.cmpi ne, %1, %c0_i32_0 : i32
    scf.if %2 {
      %c0_9 = arith.constant 0 : index
      %c0_10 = arith.constant 0 : index
      %12 = vector.load %arg2[%c0_9, %c0_10] : memref<8x16xf32, #tpu.memory_space<vmem>>, vector<8x16xf32>
      %c0_11 = arith.constant 0 : index
      %c0_12 = arith.constant 0 : index
      %13 = vector.load %arg3[%c0_11, %c0_12] : memref<16x128xf32, #tpu.memory_space<vmem>>, vector<16x128xf32>
      %cst_13 = arith.constant dense<0.000000e+00> : vector<8x128xf32>
      %14 = tpu.matmul %12, %13, %cst_13 {dimension_numbers = #tpu.dot_dimension_numbers<[1], [0], [0], [1], [0, 0, 1, 1], [], []>} : vector<8x16xf32>, vector<16x128xf32>, vector<8x128xf32> -> vector<8x128xf32>
      %c0_14 = arith.constant 0 : index
      %c0_15 = arith.constant 0 : index
      %15 = vector.load %arg4[%c0_14, %c0_15] : memref<1x128xf32, #tpu.memory_space<vmem>>, vector<1x128xf32>
      %16 = vector.broadcast %15 : vector<1x128xf32> to vector<8x128xf32>
      %17 = arith.addf %14, %16 : vector<8x128xf32>
      %cst_16 = arith.constant 0.000000e+00 : f32
      %18 = vector.broadcast %cst_16 : f32 to vector<8x128xf32>
      %19 = arith.maximumf %17, %18 : vector<8x128xf32>
      %c0_17 = arith.constant 0 : index
      %c0_18 = arith.constant 0 : index
      %20 = vector.load %arg8[%c0_17, %c0_18] : memref<8x128xf32, #tpu.memory_space<vmem>>, vector<8x128xf32>
      tpu.vector_store %arg8[%c0_17, %c0_18], %19 {strides = array<i32>} : memref<8x128xf32, #tpu.memory_space<vmem>>, vector<8x128xf32>,
    } else {
    }
    %c0 = arith.constant 0 : index
    %c0_1 = arith.constant 0 : index
    %3 = vector.load %arg8[%c0, %c0_1] : memref<8x128xf32, #tpu.memory_space<vmem>>, vector<8x128xf32>
    %c0_2 = arith.constant 0 : index
    %c0_3 = arith.constant 0 : index
    %4 = vector.load %arg5[%c0_2, %c0_3] : memref<128x128xf32, #tpu.memory_space<vmem>>, vector<128x128xf32>
    %cst = arith.constant dense<0.000000e+00> : vector<8x128xf32>
    %5 = tpu.matmul %3, %4, %cst {dimension_numbers = #tpu.dot_dimension_numbers<[1], [0], [0], [1], [0, 0, 1, 1], [], []>} : vector<8x128xf32>, vector<128x128xf32>, vector<8x128xf32> -> vector<8x128xf32>
    %c0_4 = arith.constant 0 : index
    %c0_5 = arith.constant 0 : index
    %6 = vector.load %arg6[%c0_4, %c0_5] : memref<1x128xf32, #tpu.memory_space<vmem>>, vector<1x128xf32>
    %7 = vector.broadcast %6 : vector<1x128xf32> to vector<8x128xf32>
    %8 = arith.addf %5, %7 : vector<8x128xf32>
    %cst_6 = arith.constant 0.000000e+00 : f32
    %9 = vector.broadcast %cst_6 : f32 to vector<8x128xf32>
    %10 = arith.maximumf %8, %9 : vector<8x128xf32>
    %c0_7 = arith.constant 0 : index
    %c0_8 = arith.constant 0 : index
    %11 = vector.load %arg7[%c0_7, %c0_8] : memref<8x128xf32, #tpu.memory_space<vmem>>, vector<8x128xf32>
    tpu.vector_store %arg7[%c0_7, %c0_8], %10 {strides = array<i32>} : memref<8x128xf32, #tpu.memory_space<vmem>>, vector<8x128xf32>,
    return
  }
  func.func @transform_0(%arg0: i32, %arg1: i32) -> (i32, i32) {
    %c0_i32 = arith.constant 0 : i32
    %c0_i32_0 = arith.constant 0 : i32
    return %arg0, %c0_i32 : i32, i32
  }
  func.func @transform_1(%arg0: i32, %arg1: i32) -> (i32, i32) {
    %c0_i32 = arith.constant 0 : i32
    %c0_i32_0 = arith.constant 0 : i32
    %c0_i32_1 = arith.constant 0 : i32
    return %c0_i32, %c0_i32_0 : i32, i32
  }
  func.func @transform_2(%arg0: i32, %arg1: i32) -> (i32, i32) {
    %c0_i32 = arith.constant 0 : i32
    %c0_i32_0 = arith.constant 0 : i32
    %c0_i32_1 = arith.constant 0 : i32
    return %c0_i32, %c0_i32_0 : i32, i32
  }
  func.func @transform_3(%arg0: i32, %arg1: i32) -> (i32, i32) {
    %c0_i32 = arith.constant 0 : i32
    %c0_i32_0 = arith.constant 0 : i32
    return %c0_i32, %arg1 : i32, i32
  }
  func.func @transform_4(%arg0: i32, %arg1: i32) -> (i32, i32) {
    %c0_i32 = arith.constant 0 : i32
    %c0_i32_0 = arith.constant 0 : i32
    return %c0_i32, %arg1 : i32, i32
  }
  func.func @transform_5(%arg0: i32, %arg1: i32) -> (i32, i32) {
    %c0_i32 = arith.constant 0 : i32
    return %arg0, %arg1 : i32, i32
  }
}

</mosaic_0001>

<llo_original>
// kernel: tpu_custom_call.1
$region0: #{tpu_custom_call.1}
  #allocation0 [shape = 'u32[]', space=smem, size = 0x4, offset = 0x4, fixed_abs, tag = 'smem constant byte address 0x4 - core index']
  #allocation1 [shape = 'u32[144,128]{1,0:T(1,128)}', space=vmem, size = 0x12000, scoped, tag = 'internal scratch']
  #allocation2 [shape = 'f32[8,128]{1,0:T(8,128)}', space=vmem, size = 0x1000, scoped, tag = 'scratch operand']
  %s0 = inlined_call_operand.hbm [shape: f32[8,16], index: 0, kind: input, shape index: {}]
  %s1 = inlined_call_operand.hbm [shape: f32[16,128], index: 1, kind: input, shape index: {}]
  %s2 = inlined_call_operand.vmem [shape: f32[1,128], index: 2, kind: input, shape index: {}]
  %s3 = inlined_call_operand.hbm [shape: f32[128,128], index: 3, kind: input, shape index: {}]
  %s4 = inlined_call_operand.vmem [shape: f32[1,128], index: 4, kind: input, shape index: {}]
  %s5 = inlined_call_operand.hbm [shape: f32[8,32], index: 5, kind: output, shape index: {}]
  %s6 = sld [smem:[#allocation0]]
  $region46: #{tpu_custom_call.1} parent=0
    _
  %s8 = ssub.s32 1, %s6
  %s9 = scalar_select 0, %s8, %s6
  $region1: #{tpu_custom_call.1} parent=0
    #allocation3 [shape = 'u8[4096]{0}', space=vmem, size = 0x1000, scoped, tag = 'input window, operand 0, single buffered']
    #allocation4 [shape = 's32[1]{0}', space=sflag, size = 0x4, scoped, tag = 'scoped memory for tpu_custom_call.1']
    #allocation5 [shape = 's32[1]{0}', space=sflag, size = 0x4, scoped, tag = 'scoped memory for tpu_custom_call.1']
    #allocation6 [shape = 'u8[8192]{0}', space=vmem, size = 0x2000, scoped, tag = 'input window, operand 1, single buffered']
    #allocation7 [shape = 's32[1]{0}', space=sflag, size = 0x4, scoped, tag = 'scoped memory for tpu_custom_call.1']
    #allocation8 [shape = 'u8[65536]{0}', space=vmem, size = 0x10000, scoped, tag = 'input window, operand 3, single buffered']
    #allocation9 [shape = 'u8[4096]{0}', space=vmem, size = 0x1000, scoped, tag = 'output window, operand 0, single buffered']
    %10 = vsyncpa [#allocation4], 0
    %11 = vsyncpa [#allocation7], 0
    %12 = vsyncpa [#allocation5], 0
    // Predicated region
    $region2: #{tpu_custom_call.1} parent=1 // pred_check
      _
    $region3: #{tpu_custom_call.1} parent=1 // pred_check_branch
      %14 = sbr.rel (0) target = $region5
    $region4: #{tpu_custom_call.1} parent=1 // pred_region
      %s16 = ssub.s32 128, 128
      %17 = vsyncadd [#allocation4], %s16
      %s19 = sshll.u32 [#allocation3], 4
      %s20 = int_to_ptr.vmem [resolvable:$true] %s19
      %22 = dma.hbm_to_vmem [thread:$0]  %s0, 128, %s20, [#allocation4]
    $region5: #{tpu_custom_call.1} parent=1 // pred_fallthru
      _
    // Predicated region
    $region6: #{tpu_custom_call.1} parent=1 // pred_check
      _
    $region7: #{tpu_custom_call.1} parent=1 // pred_check_branch
      %24 = sbr.rel (0) target = $region9
    $region8: #{tpu_custom_call.1} parent=1 // pred_region
      %s26 = ssub.s32 256, 256
      %27 = vsyncadd [#allocation7], %s26
      %s28 = sshll.u32 [#allocation6], 4
      %s29 = int_to_ptr.vmem [resolvable:$true] %s28
      %34 = dma.hbm_to_vmem [thread:$0]  %s1, 256, %s29, [#allocation7], 128, 128, 8
    $region9: #{tpu_custom_call.1} parent=1 // pred_fallthru
      _
    // Predicated region
    $region10: #{tpu_custom_call.1} parent=1 // pred_check
      _
    $region11: #{tpu_custom_call.1} parent=1 // pred_check_branch
      %36 = sbr.rel (0) target = $region13
    $region12: #{tpu_custom_call.1} parent=1 // pred_region
      _
    $region13: #{tpu_custom_call.1} parent=1 // pred_fallthru
      _
    // Predicated region
    $region14: #{tpu_custom_call.1} parent=1 // pred_check
      _
    $region15: #{tpu_custom_call.1} parent=1 // pred_check_branch
      %38 = sbr.rel (0) target = $region17
    $region16: #{tpu_custom_call.1} parent=1 // pred_region
      %s40 = ssub.s32 2048, 2048
      %41 = vsyncadd [#allocation7], %s40
      %s42 = sshll.u32 [#allocation8], 4
      %s43 = int_to_ptr.vmem [resolvable:$true] %s42
      %48 = dma.hbm_to_vmem [thread:$0]  %s3, 2048, %s43, [#allocation7], 128, 128, 8
    $region17: #{tpu_custom_call.1} parent=1 // pred_fallthru
      _
    // Predicated region
    $region18: #{tpu_custom_call.1} parent=1 // pred_check
      _
    $region19: #{tpu_custom_call.1} parent=1 // pred_check_branch
      %50 = sbr.rel (0) target = $region21
    $region20: #{tpu_custom_call.1} parent=1 // pred_region
      _
    $region21: #{tpu_custom_call.1} parent=1 // pred_fallthru
      _
    // Predicated region
    $region22: #{tpu_custom_call.1} parent=1 // pred_check
      _
    $region23: #{tpu_custom_call.1} parent=1 // pred_check_branch
      %52 = sbr.rel (0) target = $region25
    $region24: #{tpu_custom_call.1} parent=1 // pred_region
      %53 = dma.done [#allocation4], 128
    $region25: #{tpu_custom_call.1} parent=1 // pred_fallthru
      _
    // Predicated region
    $region26: #{tpu_custom_call.1} parent=1 // pred_check
      _
    $region27: #{tpu_custom_call.1} parent=1 // pred_check_branch
      %55 = sbr.rel (0) target = $region29
    $region28: #{tpu_custom_call.1} parent=1 // pred_region
      %56 = dma.done [#allocation7], 256
    $region29: #{tpu_custom_call.1} parent=1 // pred_fallthru
      _
    // Predicated region
    $region30: #{tpu_custom_call.1} parent=1 // pred_check
      _
    $region31: #{tpu_custom_call.1} parent=1 // pred_check_branch
      %58 = sbr.rel (0) target = $region33
    $region32: #{tpu_custom_call.1} parent=1 // pred_region
      %59 = dma.done [#allocation7], 2048
    $region33: #{tpu_custom_call.1} parent=1 // pred_fallthru
      _
    %p60 = scmp.eq.s32.totalorder 0, 0
    // Predicated region
    $region34: #{tpu_custom_call.1} parent=1 // pred_check
      %p61 = pneg %p60
    $region35: #{tpu_custom_call.1} parent=1 // pred_check_branch
      %63 = sbr.rel (%p61) target = $region37
    $region36: #{tpu_custom_call.1} parent=1 // pred_region
      %v64 = vld [vmem:[#allocation3] sm:$0xff]
      %v65 = vld [vmem:[#allocation6] sm:$0xff]
      %v66 = vld [vmem:[#allocation6 + $0x8] sm:$0xff]
      %v67 = vld [vmem:[%s2] sm:$0x1]
      %v69 = vlaneseq
      %v70 = vshrl.u32 %v69, 7
      %v71 = vsub.s32 0, %v70
      %v72 = vrot.slane %v67, %v71
      %vm74 = vcmask 130048
      %v76 = vsel %vm74, %v64, 0
      %78 = vmatprep.subr.mxu0 0.0
      %79 = vmatpush1.msra.mxu0 %v65
      %80 = vmatprep.subr.mxu0 0.0
      %81 = vmatpush1.msra.mxu0 %v66
      %82 = vmatprep.subr.mxu0 0.0
      %83 = vmatpush1.msra.mxu0 0.0
      %84 = vmatprep.subr.mxu0 0.0
      %85 = vmatpush1.msra.mxu0 0.0
      %86 = vmatprep.subr.mxu0 0.0
      %87 = vmatpush1.msra.mxu0 0.0
      %88 = vmatprep.subr.mxu0 0.0
      %89 = vmatpush1.msra.mxu0 0.0
      %90 = vmatprep.subr.mxu0 0.0
      %91 = vmatpush1.msra.mxu0 0.0
      %92 = vmatprep.subr.mxu0 0.0
      %93 = vmatpush1.msra.mxu0 0.0
      %94 = vmatprep.subr.mxu0 0.0
      %95 = vmatpush1.msra.mxu0 0.0
      %96 = vmatprep.subr.mxu0 0.0
      %97 = vmatpush1.msra.mxu0 0.0
      %98 = vmatprep.subr.mxu0 0.0
      %99 = vmatpush1.msra.mxu0 0.0
      %100 = vmatprep.subr.mxu0 0.0
      %101 = vmatpush1.msra.mxu0 0.0
      %102 = vmatprep.subr.mxu0 0.0
      %103 = vmatpush1.msra.mxu0 0.0
      %104 = vmatprep.subr.mxu0 0.0
      %105 = vmatpush1.msra.mxu0 0.0
      %106 = vmatprep.subr.mxu0 0.0
      %107 = vmatpush1.msra.mxu0 0.0
      %108 = vmatprep.subr.mxu0 0.0
      %109 = vmatpush1.msra.mxu0 0.0
      %110 = vmatprep.subr.mxu0 0.0
      %111 = vmatpush1.msra.mxu0 0.0
      %112 = vmatprep.subr.mxu0 0.0
      %113 = vmatpush1.msra.mxu0 0.0
      %114 = vmatprep.subr.mxu0 0.0
      %115 = vmatpush1.msra.mxu0 0.0
      %116 = vmatprep.subr.mxu0 0.0
      %117 = vmatpush1.msra.mxu0 0.0
      %118 = vmatprep.subr.mxu0 0.0
      %119 = vmatpush1.msra.mxu0 0.0
      %120 = vmatprep.subr.mxu0 0.0
      %121 = vmatpush1.msra.mxu0 0.0
      %122 = vmatprep.subr.mxu0 0.0
      %123 = vmatpush1.msra.mxu0 0.0
      %124 = vmatprep.subr.mxu0 0.0
      %125 = vmatpush1.msra.mxu0 0.0
      %126 = vmatprep.subr.mxu0 0.0
      %127 = vmatpush1.msra.mxu0 0.0
      %128 = vmatprep.subr.mxu0 0.0
      %129 = vmatpush1.msra.mxu0 0.0
      %130 = vmatprep.subr.mxu0 0.0
      %131 = vmatpush1.msra.mxu0 0.0
      %132 = vmatprep.subr.mxu0 0.0
      %133 = vmatpush1.msra.mxu0 0.0
      %134 = vmatprep.subr.mxu0 0.0
      %135 = vmatpush1.msra.mxu0 0.0
      %136 = vmatprep.subr.mxu0 0.0
      %137 = vmatpush1.msra.mxu0 0.0
      %138 = vmatprep.subr.mxu0 0.0
      %139 = vmatpush1.msra.mxu0 0.0
      %140 = vmatprep.subr.mxu0 0.0
      %141 = vmatpush1.msra.mxu0 0.0
      %142 = vmatprep.mubr.f32.mxu0 0.0
      %143 = vmatmul.mubr.f32.gmra.mrb[0].mxu0 %v76
      %v144 = vpop.f32.mrb[0].mxu0
      %v145 = vadd.f32 %v72, %v144
      %v146 = vpop.f32.mrb[0].mxu0
      %147 = vdwg.mxu0
      %v148 = vmax.f32 %v145, 0.0
      %149 = vst [vmem:[#allocation2] sm:$0xff] %v148
    $region37: #{tpu_custom_call.1} parent=1 // pred_fallthru
      _
    %v150 = vld [vmem:[#allocation2] sm:$0xff]
    %v151 = vld [vmem:[#allocation8] sm:$0xff]
    %v152 = vld [vmem:[#allocation8 + $0x8] sm:$0xff]
    %v153 = vld [vmem:[#allocation8 + $0x10] sm:$0xff]
    %v154 = vld [vmem:[#allocation8 + $0x18] sm:$0xff]
    %v155 = vld [vmem:[#allocation8 + $0x20] sm:$0xff]
    %v156 = vld [vmem:[#allocation8 + $0x28] sm:$0xff]
    %v157 = vld [vmem:[#allocation8 + $0x30] sm:$0xff]
    %v158 = vld [vmem:[#allocation8 + $0x38] sm:$0xff]
    %v159 = vld [vmem:[#allocation8 + $0x40] sm:$0xff]
    %v160 = vld [vmem:[#allocation8 + $0x48] sm:$0xff]
    %v161 = vld [vmem:[#allocation8 + $0x50] sm:$0xff]
    %v162 = vld [vmem:[#allocation8 + $0x58] sm:$0xff]
    %v163 = vld [vmem:[#allocation8 + $0x60] sm:$0xff]
    %v164 = vld [vmem:[#allocation8 + $0x68] sm:$0xff]
    %v165 = vld [vmem:[#allocation8 + $0x70] sm:$0xff]
    %v166 = vld [vmem:[#allocation8 + $0x78] sm:$0xff]
    %v167 = vld [vmem:[%s4] sm:$0x1]
    %v169 = vlaneseq
    %v170 = vshrl.u32 %v169, 7
    %v171 = vsub.s32 0, %v170
    %v172 = vrot.slane %v167, %v171
    %174 = vmatprep.subr.mxu0 0.0
    %175 = vmatpush1.msra.mxu0 %v151
    %176 = vmatprep.subr.mxu0 0.0
    %177 = vmatpush1.msra.mxu0 %v152
    %178 = vmatprep.subr.mxu0 0.0
    %179 = vmatpush1.msra.mxu0 %v153
    %180 = vmatprep.subr.mxu0 0.0
    %181 = vmatpush1.msra.mxu0 %v154
    %182 = vmatprep.subr.mxu0 0.0
    %183 = vmatpush1.msra.mxu0 %v155
    %184 = vmatprep.subr.mxu0 0.0
    %185 = vmatpush1.msra.mxu0 %v156
    %186 = vmatprep.subr.mxu0 0.0
    %187 = vmatpush1.msra.mxu0 %v157
    %188 = vmatprep.subr.mxu0 0.0
    %189 = vmatpush1.msra.mxu0 %v158
    %190 = vmatprep.subr.mxu0 0.0
    %191 = vmatpush1.msra.mxu0 %v159
    %192 = vmatprep.subr.mxu0 0.0
    %193 = vmatpush1.msra.mxu0 %v160
    %194 = vmatprep.subr.mxu0 0.0
    %195 = vmatpush1.msra.mxu0 %v161
    %196 = vmatprep.subr.mxu0 0.0
    %197 = vmatpush1.msra.mxu0 %v162
    %198 = vmatprep.subr.mxu0 0.0
    %199 = vmatpush1.msra.mxu0 %v163
    %200 = vmatprep.subr.mxu0 0.0
    %201 = vmatpush1.msra.mxu0 %v164
    %202 = vmatprep.subr.mxu0 0.0
    %203 = vmatpush1.msra.mxu0 %v165
    %204 = vmatprep.subr.mxu0 0.0
    %205 = vmatpush1.msra.mxu0 %v166
    %206 = vmatprep.subr.mxu0 0.0
    %207 = vmatpush1.msra.mxu0 0.0
    %208 = vmatprep.subr.mxu0 0.0
    %209 = vmatpush1.msra.mxu0 0.0
    %210 = vmatprep.subr.mxu0 0.0
    %211 = vmatpush1.msra.mxu0 0.0
    %212 = vmatprep.subr.mxu0 0.0
    %213 = vmatpush1.msra.mxu0 0.0
    %214 = vmatprep.subr.mxu0 0.0
    %215 = vmatpush1.msra.mxu0 0.0
    %216 = vmatprep.subr.mxu0 0.0
    %217 = vmatpush1.msra.mxu0 0.0
    %218 = vmatprep.subr.mxu0 0.0
    %219 = vmatpush1.msra.mxu0 0.0
    %220 = vmatprep.subr.mxu0 0.0
    %221 = vmatpush1.msra.mxu0 0.0
    %222 = vmatprep.subr.mxu0 0.0
    %223 = vmatpush1.msra.mxu0 0.0
    %224 = vmatprep.subr.mxu0 0.0
    %225 = vmatpush1.msra.mxu0 0.0
    %226 = vmatprep.subr.mxu0 0.0
    %227 = vmatpush1.msra.mxu0 0.0
    %228 = vmatprep.subr.mxu0 0.0
    %229 = vmatpush1.msra.mxu0 0.0
    %230 = vmatprep.subr.mxu0 0.0
    %231 = vmatpush1.msra.mxu0 0.0
    %232 = vmatprep.subr.mxu0 0.0
    %233 = vmatpush1.msra.mxu0 0.0
    %234 = vmatprep.subr.mxu0 0.0
    %235 = vmatpush1.msra.mxu0 0.0
    %236 = vmatprep.subr.mxu0 0.0
    %237 = vmatpush1.msra.mxu0 0.0
    %238 = vmatprep.mubr.f32.mxu0 0.0
    %239 = vmatmul.mubr.f32.gmra.mrb[0].mxu0 %v150
    %v240 = vpop.f32.mrb[0].mxu0
    %v241 = vadd.f32 %v172, %v240
    %v242 = vpop.f32.mrb[0].mxu0
    %243 = vdwg.mxu0
    %v244 = vmax.f32 %v241, 0.0
    %245 = vst [vmem:[#allocation9] sm:$0xff] %v244
    // Predicated region
    $region38: #{tpu_custom_call.1} parent=1 // pred_check
      _
    $region39: #{tpu_custom_call.1} parent=1 // pred_check_branch
      %247 = sbr.rel (0) target = $region41
    $region40: #{tpu_custom_call.1} parent=1 // pred_region
      %s249 = ssub.s32 128, 128
      %250 = vsyncadd [#allocation5], %s249
      %s252 = sshll.u32 [#allocation9], 4
      %s253 = int_to_ptr.vmem [resolvable:$true] %s252
      %255 = dma.vmem_to_hbm [thread:$0]  %s253, 128, %s5, [#allocation5]
    $region41: #{tpu_custom_call.1} parent=1 // pred_fallthru
      _
    // Predicated region
    $region42: #{tpu_custom_call.1} parent=1 // pred_check
      _
    $region43: #{tpu_custom_call.1} parent=1 // pred_check_branch
      %257 = sbr.rel (0) target = $region45
    $region44: #{tpu_custom_call.1} parent=1 // pred_region
      %258 = dma.done [#allocation5], 128
    $region45: #{tpu_custom_call.1} parent=1 // pred_fallthru
      _
    %259 = vsyncpa [#allocation4], 1
    %260 = vsyncpa [#allocation7], 1
    %261 = vsyncpa [#allocation5], 1

</llo_original>
